<compile_context>
chip_gen: v7x
topology: tpu7x:2x2x1
jax: 0.10.0
libtpu: 0.0.40
codegen_flags: <defaults>
</compile_context>

<pallas_src>
import math

import jax
import jax.numpy as jnp
from jax.experimental import pallas as pl
from jax.experimental.pallas import tpu as pltpu

_INV_SQRT2 = 0.7071067811865476  # 1 / sqrt(2)


def _gelu_exact_f32(x):
    # Exact GELU: 0.5 * x * (1 + erf(x / sqrt(2)))  (matches approximate='none').
    return 0.5 * x * (1.0 + jax.lax.erf(x * jnp.float32(_INV_SQRT2)))


# ----------------------------------------------------------------------------
# Path A: weights fully resident in VMEM, grid over row tiles only.
# ----------------------------------------------------------------------------
def _mlp_kernel_fused(x_ref, w1_ref, b1_ref, w2_ref, b2_ref, o_ref):
    # x_ref: (tm, C) bf16, w1_ref: (C, H) bf16, b1_ref: (1, H) f32,
    # w2_ref: (H, C) bf16, b2_ref: (1, C) f32, o_ref: (tm, C)
    h = jnp.dot(x_ref[...], w1_ref[...], preferred_element_type=jnp.float32)
    h = _gelu_exact_f32(h + b1_ref[...])
    y = jnp.dot(h.astype(w2_ref.dtype), w2_ref[...],
                preferred_element_type=jnp.float32)
    o_ref[...] = (y + b2_ref[...]).astype(o_ref.dtype)


# ----------------------------------------------------------------------------
# Path B: hidden dim tiled, f32 accumulator scratch, init/finalize via pl.when.
# ----------------------------------------------------------------------------
def _mlp_kernel_htiled(x_ref, w1_ref, b1_ref, w2_ref, b2_ref, o_ref, acc_ref):
    hk = pl.program_id(1)

    @pl.when(hk == 0)
    def _():
        acc_ref[...] = jnp.zeros_like(acc_ref)

    # c_fc over this H block: (tm, C) @ (C, th) -> (tm, th), f32 accumulate.
    h = jnp.dot(x_ref[...], w1_ref[...], preferred_element_type=jnp.float32)
    h = _gelu_exact_f32(h + b1_ref[...])

    # c_proj partial sum: (tm, th) @ (th, C) -> (tm, C), accumulate in f32 scratch.
    acc_ref[...] += jnp.dot(h.astype(w2_ref.dtype), w2_ref[...],
                            preferred_element_type=jnp.float32)

    @pl.when(hk == pl.num_programs(1) - 1)
    def _():
        o_ref[...] = (acc_ref[...] + b2_ref[...]).astype(o_ref.dtype)


def _round_up(x, m):
    return (x + m - 1) // m * m


def _pick_h_tile(H, requested):
    """Largest lane-aligned (multiple of 128) tile <= requested dividing H."""
    for cand in (4096, 2048, 1024, 512, 256, 128):
        if cand <= requested and H % cand == 0:
            return cand
    return H  # fall back to full H (always legal: equals the full dim)


def _vmem_need_fused(tm, C, H, out_itemsize, mm_itemsize):
    f32 = 4
    need = 0
    need += 2 * tm * C * mm_itemsize          # x tile (double-buffered)
    need += 2 * tm * C * out_itemsize         # output tile (double-buffered)
    need += 2 * (C * H + H * C) * mm_itemsize # W1 + W2 (buffer pair, resident)
    need += 2 * 8 * (_round_up(H, 128) + _round_up(C, 128)) * f32  # biases
    need += tm * H * (f32 + mm_itemsize)      # h intermediate (f32 + bf16 cast)
    return need


def _vmem_need_htiled(tm, th, C, out_itemsize, mm_itemsize):
    f32 = 4
    need = 0
    need += 2 * tm * C * mm_itemsize          # x tile
    need += 2 * C * th * mm_itemsize          # W1 block
    need += 2 * th * C * mm_itemsize          # W2 block
    need += 2 * 8 * (_round_up(th, 128) + _round_up(C, 128)) * f32  # bias blocks
    need += 2 * tm * C * out_itemsize         # output tile
    need += tm * C * f32                      # f32 accumulator scratch
    need += tm * th * (f32 + mm_itemsize)     # h intermediate
    return need


def mlp_pallas(x, w1, b1, w2, b2, *, tm=256, th=2048, matmul_dtype=jnp.bfloat16):
    """x: (B, T, C). w1: (C, 4C), b1: (4C,), w2: (4C, C), b2: (C,)."""
    B, T, C = x.shape
    Cin, H = w1.shape
    assert Cin == C and w2.shape == (H, C) and b1.shape == (H,) and b2.shape == (C,)

    M = B * T
    tm = _round_up(min(tm, _round_up(M, 8)), 8)
    M_pad = _round_up(M, tm)

    x2d = x.reshape(M, C)
    if M_pad != M:
        # Padded tail rows are computed and then discarded below.
        x2d = jnp.pad(x2d, ((0, M_pad - M), (0, 0)))

    # bf16 operands for the MXU; biases / accumulation / GELU stay in f32.
    x2d = x2d.astype(matmul_dtype)
    w1c = w1.astype(matmul_dtype)
    w2c = w2.astype(matmul_dtype)
    b1_2d = b1.reshape(1, H).astype(jnp.float32)
    b2_2d = b2.reshape(1, C).astype(jnp.float32)

    out_dtype = x.dtype
    mm_itemsize = jnp.dtype(matmul_dtype).itemsize
    out_itemsize = jnp.dtype(out_dtype).itemsize

    # Advisory cost estimate for XLA scheduling around the kernel.
    flops = 4 * M_pad * C * H                 # two (M,C,H)-sized matmuls
    transcendentals = M_pad * H               # erf per hidden activation

    # Decide between the weights-resident path and the H-tiled path.
    need_fused = _vmem_need_fused(tm, C, H, out_itemsize, mm_itemsize)
    use_fused = need_fused <= (40 << 20)      # conservative vs. 64 MiB (v7x)

    if use_fused:
        grid = (M_pad // tm,)
        vmem_limit = min(need_fused + (16 << 20), 64 << 20)
        bytes_accessed = (
            M_pad * C * mm_itemsize               # x, read once
            + 2 * C * H * mm_itemsize             # weights, read once (resident)
            + (H + C) * 4                         # biases
            + M_pad * C * out_itemsize            # output
        )
        out2d = pl.pallas_call(
            _mlp_kernel_fused,
            out_shape=jax.ShapeDtypeStruct((M_pad, C), out_dtype),
            grid_spec=pltpu.PrefetchScalarGridSpec(
                num_scalar_prefetch=0,
                grid=grid,
                in_specs=[
                    pl.BlockSpec((tm, C), lambda i: (i, 0)),  # x row tile
                    pl.BlockSpec((C, H), lambda i: (0, 0)),   # W1 (resident)
                    pl.BlockSpec((1, H), lambda i: (0, 0)),   # b1 (resident)
                    pl.BlockSpec((H, C), lambda i: (0, 0)),   # W2 (resident)
                    pl.BlockSpec((1, C), lambda i: (0, 0)),   # b2 (resident)
                ],
                out_specs=pl.BlockSpec((tm, C), lambda i: (i, 0)),
            ),
            compiler_params=pltpu.CompilerParams(
                dimension_semantics=("parallel",),
                vmem_limit_bytes=vmem_limit,
            ),
            cost_estimate=pl.CostEstimate(
                flops=flops,
                transcendentals=transcendentals,
                bytes_accessed=bytes_accessed,
            ),
        )(x2d, w1c, b1_2d, w2c, b2_2d)
    else:
        th = _pick_h_tile(H, min(th, H))
        grid = (M_pad // tm, H // th)  # reduction (H) axis last
        vmem_limit = min(
            max(_vmem_need_htiled(tm, th, C, out_itemsize, mm_itemsize) + (8 << 20),
                32 << 20),
            64 << 20)
        bytes_accessed = (
            M_pad * C * mm_itemsize                     # x
            + grid[0] * 2 * C * H * mm_itemsize         # weights per row tile
            + (H + C) * 4                               # biases
            + M_pad * C * out_itemsize                  # output
        )
        out2d = pl.pallas_call(
            _mlp_kernel_htiled,
            out_shape=jax.ShapeDtypeStruct((M_pad, C), out_dtype),
            grid_spec=pltpu.PrefetchScalarGridSpec(
                num_scalar_prefetch=0,
                grid=grid,
                in_specs=[
                    pl.BlockSpec((tm, C), lambda i, k: (i, 0)),   # x row tile
                    pl.BlockSpec((C, th), lambda i, k: (0, k)),   # W1 column block
                    pl.BlockSpec((1, th), lambda i, k: (0, k)),   # b1 block
                    pl.BlockSpec((th, C), lambda i, k: (k, 0)),   # W2 row block
                    pl.BlockSpec((1, C), lambda i, k: (0, 0)),    # b2 (resident)
                ],
                out_specs=pl.BlockSpec((tm, C), lambda i, k: (i, 0)),
                scratch_shapes=[pltpu.VMEM((tm, C), jnp.float32)],
            ),
            compiler_params=pltpu.CompilerParams(
                dimension_semantics=("parallel", "arbitrary"),
                vmem_limit_bytes=vmem_limit,
            ),
            cost_estimate=pl.CostEstimate(
                flops=flops,
                transcendentals=transcendentals,
                bytes_accessed=bytes_accessed,
            ),
        )(x2d, w1c, b1_2d, w2c, b2_2d)

    if M_pad != M:
        out2d = out2d[:M]
    return out2d.reshape(B, T, C)
    # TODO(synk): for C < 128 (like the toy test shape) the output store is a
    # masked partial-lane store; real GPT C (>=768, multiple of 128) is lane-dense.


def mlp_ref_f32(x, w1, b1, w2, b2):
    """Pure-JAX f32 reference (exact GELU), matching the PyTorch module."""
    h = jnp.einsum("btc,ch->bth", x, w1) + b1
    h = 0.5 * h * (1.0 + jax.lax.erf(h * _INV_SQRT2))
    return jnp.einsum("bth,hc->btc", h, w2) + b2


def mlp_ref_bf16(x, w1, b1, w2, b2, matmul_dtype=jnp.bfloat16):
    """Reference emulating the kernel's bf16-matmul / f32-accumulate numerics."""
    B, T, C = x.shape
    xq = x.reshape(-1, C).astype(matmul_dtype)
    h = jnp.dot(xq, w1.astype(matmul_dtype), preferred_element_type=jnp.float32) + b1
    h = 0.5 * h * (1.0 + jax.lax.erf(h * jnp.float32(_INV_SQRT2)))
    y = jnp.dot(h.astype(matmul_dtype), w2.astype(matmul_dtype),
                preferred_element_type=jnp.float32) + b2
    return y.reshape(B, T, C).astype(x.dtype)


if __name__ == "__main__":
    # Small, forward-consistent shapes: batch=2, seq=8, n_embd=32 -> hidden=128.
    B, T, C = 2, 8, 32
    H = 4 * C

    key = jax.random.PRNGKey(0)
    kx, k1, k2, k3, k4 = jax.random.split(key, 5)

    x = jax.random.normal(kx, (B, T, C), dtype=jnp.float32)

    # Deterministic PyTorch-Linear-style init: U(-1/sqrt(fan_in), 1/sqrt(fan_in)).
    bound1 = 1.0 / math.sqrt(C)
    bound2 = 1.0 / math.sqrt(H)
    w1 = jax.random.uniform(k1, (C, H), minval=-bound1, maxval=bound1, dtype=jnp.float32)
    b1 = jax.random.uniform(k2, (H,), minval=-bound1, maxval=bound1, dtype=jnp.float32)
    w2 = jax.random.uniform(k3, (H, C), minval=-bound2, maxval=bound2, dtype=jnp.float32)
    b2 = jax.random.uniform(k4, (C,), minval=-bound2, maxval=bound2, dtype=jnp.float32)

    out = mlp_pallas(x, w1, b1, w2, b2)
    out = jax.block_until_ready(out)
    assert out.shape == (B, T, C), out.shape

    # Tight check against a reference with matching bf16-matmul numerics.
    ref_bf16 = mlp_ref_bf16(x, w1, b1, w2, b2)
    err_bf16 = float(jnp.max(jnp.abs(out - ref_bf16)))
    assert jnp.allclose(out, ref_bf16, atol=2e-3, rtol=2e-3), err_bf16

    # Loose check against the pure f32 PyTorch-equivalent reference.
    ref_f32 = mlp_ref_f32(x, w1, b1, w2, b2)
    err_f32 = float(jnp.max(jnp.abs(out - ref_f32)))
    assert jnp.allclose(out, ref_f32, atol=5e-2, rtol=5e-2), err_f32

    print("KERNEL_OK")
</pallas_src>

<mosaic_0001>
module attributes {stable_mosaic.version = 11 : i64} {
  func.func @_mlp_kernel_fused(%arg0: i32, %arg1: memref<16x32xbf16, #tpu.memory_space<vmem>>, %arg2: memref<32x128xbf16, #tpu.memory_space<vmem>>, %arg3: memref<1x128xf32, #tpu.memory_space<vmem>>, %arg4: memref<128x32xbf16, #tpu.memory_space<vmem>>, %arg5: memref<1x32xf32, #tpu.memory_space<vmem>>, %arg6: memref<16x32xf32, #tpu.memory_space<vmem>>) attributes {dimension_semantics = [#tpu.dimension_semantics<parallel>], iteration_bounds = array<i64: 1>, scalar_prefetch = 0 : i64, scratch_operands = 0 : i64, tpu.core_type = #tpu.core_type<tc>, window_params = [{transform_indices = @transform_0, window_bounds = array<i64: 16, 32>}, {pipeline_mode = #tpu.pipeline_mode<synchronous>, transform_indices = @transform_1, window_bounds = array<i64: 32, 128>}, {pipeline_mode = #tpu.pipeline_mode<synchronous>, transform_indices = @transform_2, window_bounds = array<i64: 1, 128>}, {pipeline_mode = #tpu.pipeline_mode<synchronous>, transform_indices = @transform_3, window_bounds = array<i64: 128, 32>}, {pipeline_mode = #tpu.pipeline_mode<synchronous>, transform_indices = @transform_4, window_bounds = array<i64: 1, 32>}, {transform_indices = @transform_5, window_bounds = array<i64: 16, 32>}]} {
    %c0 = arith.constant 0 : index
    %c0_0 = arith.constant 0 : index
    %0 = vector.load %arg1[%c0, %c0_0] : memref<16x32xbf16, #tpu.memory_space<vmem>>, vector<16x32xbf16>
    %c0_1 = arith.constant 0 : index
    %c0_2 = arith.constant 0 : index
    %1 = vector.load %arg2[%c0_1, %c0_2] : memref<32x128xbf16, #tpu.memory_space<vmem>>, vector<32x128xbf16>
    %cst = arith.constant dense<0.000000e+00> : vector<16x128xf32>
    %2 = tpu.matmul %0, %1, %cst {dimension_numbers = #tpu.dot_dimension_numbers<[1], [0], [0], [1], [0, 0, 1, 1], [], []>} : vector<16x32xbf16>, vector<32x128xbf16>, vector<16x128xf32> -> vector<16x128xf32>
    %c0_3 = arith.constant 0 : index
    %c0_4 = arith.constant 0 : index
    %3 = vector.load %arg3[%c0_3, %c0_4] : memref<1x128xf32, #tpu.memory_space<vmem>>, vector<1x128xf32>
    %4 = vector.broadcast %3 : vector<1x128xf32> to vector<16x128xf32>
    %5 = arith.addf %2, %4 : vector<16x128xf32>
    %cst_5 = arith.constant 5.000000e-01 : f32
    %6 = vector.broadcast %cst_5 : f32 to vector<16x128xf32>
    %7 = arith.mulf %6, %5 : vector<16x128xf32>
    %cst_6 = arith.constant 0.707106769 : f32
    %8 = vector.broadcast %cst_6 : f32 to vector<16x128xf32>
    %9 = arith.mulf %5, %8 : vector<16x128xf32>
    %10 = math.erf %9 : vector<16x128xf32>
    %cst_7 = arith.constant 1.000000e+00 : f32
    %11 = vector.broadcast %cst_7 : f32 to vector<16x128xf32>
    %12 = arith.addf %11, %10 : vector<16x128xf32>
    %13 = arith.mulf %7, %12 : vector<16x128xf32>
    %14 = arith.truncf %13 : vector<16x128xf32> to vector<16x128xbf16>
    %c0_8 = arith.constant 0 : index
    %c0_9 = arith.constant 0 : index
    %15 = vector.load %arg4[%c0_8, %c0_9] : memref<128x32xbf16, #tpu.memory_space<vmem>>, vector<128x32xbf16>
    %cst_10 = arith.constant dense<0.000000e+00> : vector<16x32xf32>
    %16 = tpu.matmul %14, %15, %cst_10 {dimension_numbers = #tpu.dot_dimension_numbers<[1], [0], [0], [1], [0, 0, 1, 1], [], []>} : vector<16x128xbf16>, vector<128x32xbf16>, vector<16x32xf32> -> vector<16x32xf32>
    %c0_11 = arith.constant 0 : index
    %c0_12 = arith.constant 0 : index
    %17 = vector.load %arg5[%c0_11, %c0_12] : memref<1x32xf32, #tpu.memory_space<vmem>>, vector<1x32xf32>
    %18 = vector.broadcast %17 : vector<1x32xf32> to vector<16x32xf32>
    %19 = arith.addf %16, %18 : vector<16x32xf32>
    %c0_13 = arith.constant 0 : index
    %c0_14 = arith.constant 0 : index
    %20 = vector.load %arg6[%c0_13, %c0_14] : memref<16x32xf32, #tpu.memory_space<vmem>>, vector<16x32xf32>
    tpu.vector_store %arg6[%c0_13, %c0_14], %19 {strides = array<i32>} : memref<16x32xf32, #tpu.memory_space<vmem>>, vector<16x32xf32>,
    return
  }
  func.func @transform_0(%arg0: i32) -> (i32, i32) {
    %c0_i32 = arith.constant 0 : i32
    %c0_i32_0 = arith.constant 0 : i32
    return %arg0, %c0_i32 : i32, i32
  }
  func.func @transform_1(%arg0: i32) -> (i32, i32) {
    %c0_i32 = arith.constant 0 : i32
    %c0_i32_0 = arith.constant 0 : i32
    %c0_i32_1 = arith.constant 0 : i32
    return %c0_i32, %c0_i32_0 : i32, i32
  }
  func.func @transform_2(%arg0: i32) -> (i32, i32) {
    %c0_i32 = arith.constant 0 : i32
    %c0_i32_0 = arith.constant 0 : i32
    %c0_i32_1 = arith.constant 0 : i32
    return %c0_i32, %c0_i32_0 : i32, i32
  }
  func.func @transform_3(%arg0: i32) -> (i32, i32) {
    %c0_i32 = arith.constant 0 : i32
    %c0_i32_0 = arith.constant 0 : i32
    %c0_i32_1 = arith.constant 0 : i32
    return %c0_i32, %c0_i32_0 : i32, i32
  }
  func.func @transform_4(%arg0: i32) -> (i32, i32) {
    %c0_i32 = arith.constant 0 : i32
    %c0_i32_0 = arith.constant 0 : i32
    %c0_i32_1 = arith.constant 0 : i32
    return %c0_i32, %c0_i32_0 : i32, i32
  }
  func.func @transform_5(%arg0: i32) -> (i32, i32) {
    %c0_i32 = arith.constant 0 : i32
    %c0_i32_0 = arith.constant 0 : i32
    return %arg0, %c0_i32 : i32, i32
  }
}

</mosaic_0001>

<llo_original>
// kernel: tpu_custom_call.1
$region0: #{tpu_custom_call.1}
  #allocation0 [shape = 'u32[]', space=smem, size = 0x4, offset = 0x4, fixed_abs, tag = 'smem constant byte address 0x4 - core index']
  #allocation1 [shape = 'u32[144,128]{1,0:T(1,128)}', space=vmem, size = 0x12000, scoped, tag = 'internal scratch']
  %s0 = inlined_call_operand.vmem [shape: bf16[16,32], index: 0, kind: input, shape index: {}]
  %s1 = inlined_call_operand.vmem [shape: bf16[32,128], index: 1, kind: input, shape index: {}]
  %s2 = inlined_call_operand.vmem [shape: f32[1,128], index: 2, kind: input, shape index: {}]
  %s3 = inlined_call_operand.vmem [shape: bf16[128,32], index: 3, kind: input, shape index: {}]
  %s4 = inlined_call_operand.vmem [shape: f32[1,32], index: 4, kind: input, shape index: {}]
  %s5 = inlined_call_operand.hbm [shape: f32[16,32], index: 5, kind: output, shape index: {}]
  %s6 = sld [smem:[#allocation0]]
  $region30: #{tpu_custom_call.1} parent=0
    _
  %s8 = ssub.s32 1, %s6
  %s9 = scalar_select 0, %s8, %s6
  $region1: #{tpu_custom_call.1} parent=0
    #allocation2 [shape = 'u8[8192]{0}', space=vmem, size = 0x2000, scoped, tag = 'output window, operand 0, single buffered']
    #allocation3 [shape = 's32[1]{0}', space=sflag, size = 0x4, scoped, tag = 'scoped memory for tpu_custom_call.1']
    %10 = vsyncpa [#allocation3], 0
    // Predicated region
    $region2: #{tpu_custom_call.1} parent=1 // pred_check
      _
    $region3: #{tpu_custom_call.1} parent=1 // pred_check_branch
      %12 = sbr.rel (0) target = $region5
    $region4: #{tpu_custom_call.1} parent=1 // pred_region
      _
    $region5: #{tpu_custom_call.1} parent=1 // pred_fallthru
      _
    // Predicated region
    $region6: #{tpu_custom_call.1} parent=1 // pred_check
      _
    $region7: #{tpu_custom_call.1} parent=1 // pred_check_branch
      %14 = sbr.rel (0) target = $region9
    $region8: #{tpu_custom_call.1} parent=1 // pred_region
      _
    $region9: #{tpu_custom_call.1} parent=1 // pred_fallthru
      _
    // Predicated region
    $region10: #{tpu_custom_call.1} parent=1 // pred_check
      _
    $region11: #{tpu_custom_call.1} parent=1 // pred_check_branch
      %16 = sbr.rel (0) target = $region13
    $region12: #{tpu_custom_call.1} parent=1 // pred_region
      _
    $region13: #{tpu_custom_call.1} parent=1 // pred_fallthru
      _
    // Predicated region
    $region14: #{tpu_custom_call.1} parent=1 // pred_check
      _
    $region15: #{tpu_custom_call.1} parent=1 // pred_check_branch
      %18 = sbr.rel (0) target = $region17
    $region16: #{tpu_custom_call.1} parent=1 // pred_region
      _
    $region17: #{tpu_custom_call.1} parent=1 // pred_fallthru
      _
    // Predicated region
    $region18: #{tpu_custom_call.1} parent=1 // pred_check
      _
    $region19: #{tpu_custom_call.1} parent=1 // pred_check_branch
      %20 = sbr.rel (0) target = $region21
    $region20: #{tpu_custom_call.1} parent=1 // pred_region
      _
    $region21: #{tpu_custom_call.1} parent=1 // pred_fallthru
      _
    %v22 = vld [vmem:[%s0] sm:$0xf]
    %v23 = vld [vmem:[%s0 + $0x4] sm:$0xf]
    %v24 = vld [vmem:[%s1] sm:$0xf]
    %v25 = vld [vmem:[%s1 + $0x4] sm:$0xf]
    %v26 = vld [vmem:[%s1 + $0x8] sm:$0xf]
    %v27 = vld [vmem:[%s1 + $0xc] sm:$0xf]
    %v28 = vld [vmem:[%s2] sm:$0x1]
    %v30 = vlaneseq
    %v31 = vshrl.u32 %v30, 7
    %v32 = vsub.s32 0, %v31
    %v33 = vrot.slane %v28, %v32
    %v37 = vunpack.c.l.b16 %v22
    %v38 = vunpack.c.l.b16 %v23
    %v39 = vpack.c.b16 %v38, %v37
    %v44 = vunpack.c.l.b16 %v24
    %v45 = vunpack.c.l.b16 %v25
    %v46 = vunpack.c.l.b16 %v26
    %v47 = vunpack.c.l.b16 %v27
    %v48 = vpack.c.b16 %v45, %v44
    %v49 = vpack.c.b16 %v47, %v46
    %vm52 = vcmask 261120
    %v54 = vsel %vm52, %v39, 0
    %56 = vmatprep.subr.bf16.mxu0 0
    %57 = vmatpush1.bf16.msra.mxu0 %v48
    %58 = vmatprep.subr.bf16.mxu0 0
    %59 = vmatpush1.bf16.msra.mxu0 %v49
    %60 = vmatprep.subr.bf16.mxu0 0
    %61 = vmatpush1.bf16.msra.mxu0 0
    %62 = vmatprep.subr.bf16.mxu0 0
    %63 = vmatpush1.bf16.msra.mxu0 0
    %64 = vmatprep.subr.bf16.mxu0 0
    %65 = vmatpush1.bf16.msra.mxu0 0
    %66 = vmatprep.subr.bf16.mxu0 0
    %67 = vmatpush1.bf16.msra.mxu0 0
    %68 = vmatprep.subr.bf16.mxu0 0
    %69 = vmatpush1.bf16.msra.mxu0 0
    %70 = vmatprep.subr.bf16.mxu0 0
    %71 = vmatpush1.bf16.msra.mxu0 0
    %72 = vmatprep.subr.bf16.mxu0 0
    %73 = vmatpush1.bf16.msra.mxu0 0
    %74 = vmatprep.subr.bf16.mxu0 0
    %75 = vmatpush1.bf16.msra.mxu0 0
    %76 = vmatprep.subr.bf16.mxu0 0
    %77 = vmatpush1.bf16.msra.mxu0 0
    %78 = vmatprep.subr.bf16.mxu0 0
    %79 = vmatpush1.bf16.msra.mxu0 0
    %80 = vmatprep.subr.bf16.mxu0 0
    %81 = vmatpush1.bf16.msra.mxu0 0
    %82 = vmatprep.subr.bf16.mxu0 0
    %83 = vmatpush1.bf16.msra.mxu0 0
    %84 = vmatprep.subr.bf16.mxu0 0
    %85 = vmatpush1.bf16.msra.mxu0 0
    %86 = vmatprep.subr.bf16.mxu0 0
    %87 = vmatpush1.bf16.msra.mxu0 0
    %88 = vmatprep.mubr.bf16.mxu0 0
    %89 = vmatmul.mubr.bf16.gmra.mrb[0].mxu0 %v54
    %v90 = vpop.f32.mrb[0].mxu0
    %v91 = vadd.f32 %v33, %v90
    %v92 = vpop.f32.mrb[0].mxu0
    %v93 = vpop.f32.mrb[0].mxu0
    %v94 = vadd.f32 %v33, %v93
    %v95 = vpop.f32.mrb[0].mxu0
    %96 = vdwg.mxu0
    %v97 = vmul.f32 %v91, 0.5
    %v98 = vmul.f32 %v94, 0.5
    %v99 = vmul.f32 %v91, 0.70710677
    %v100 = vmul.f32 %v94, 0.70710677
    %v101 = verf.f32.pop %v99
    %v102 = verf.f32.pop %v100
    %v103 = vadd.f32 %v101, 1.0
    %v104 = vadd.f32 %v102, 1.0
    %v105 = vmul.f32 %v97, %v103
    %v106 = vmul.f32 %v98, %v104
    %v107 = vpack.c.bf16 %v106, %v105
    %v108 = vld [vmem:[%s3] sm:$0xf]
    %v109 = vld [vmem:[%s3 + $0x4] sm:$0xf]
    %v110 = vld [vmem:[%s3 + $0x8] sm:$0xf]
    %v111 = vld [vmem:[%s3 + $0xc] sm:$0xf]
    %v112 = vld [vmem:[%s3 + $0x10] sm:$0xf]
    %v113 = vld [vmem:[%s3 + $0x14] sm:$0xf]
    %v114 = vld [vmem:[%s3 + $0x18] sm:$0xf]
    %v115 = vld [vmem:[%s3 + $0x1c] sm:$0xf]
    %v116 = vld [vmem:[%s3 + $0x20] sm:$0xf]
    %v117 = vld [vmem:[%s3 + $0x24] sm:$0xf]
    %v118 = vld [vmem:[%s3 + $0x28] sm:$0xf]
    %v119 = vld [vmem:[%s3 + $0x2c] sm:$0xf]
    %v120 = vld [vmem:[%s3 + $0x30] sm:$0xf]
    %v121 = vld [vmem:[%s3 + $0x34] sm:$0xf]
    %v122 = vld [vmem:[%s3 + $0x38] sm:$0xf]
    %v123 = vld [vmem:[%s3 + $0x3c] sm:$0xf]
    %v124 = vld [vmem:[%s4] sm:$0x1]
    %v126 = vlaneseq
    %v127 = vshrl.u32 %v126, 7
    %v128 = vsub.s32 0, %v127
    %v129 = vrot.slane %v124, %v128
    %v147 = vunpack.c.l.b16 %v108
    %v148 = vunpack.c.l.b16 %v109
    %v149 = vunpack.c.l.b16 %v110
    %v150 = vunpack.c.l.b16 %v111
    %v151 = vunpack.c.l.b16 %v112
    %v152 = vunpack.c.l.b16 %v113
    %v153 = vunpack.c.l.b16 %v114
    %v154 = vunpack.c.l.b16 %v115
    %v155 = vunpack.c.l.b16 %v116
    %v156 = vunpack.c.l.b16 %v117
    %v157 = vunpack.c.l.b16 %v118
    %v158 = vunpack.c.l.b16 %v119
    %v159 = vunpack.c.l.b16 %v120
    %v160 = vunpack.c.l.b16 %v121
    %v161 = vunpack.c.l.b16 %v122
    %v162 = vunpack.c.l.b16 %v123
    %v163 = vpack.c.b16 %v148, %v147
    %v164 = vpack.c.b16 %v150, %v149
    %v165 = vpack.c.b16 %v152, %v151
    %v166 = vpack.c.b16 %v154, %v153
    %v167 = vpack.c.b16 %v156, %v155
    %v168 = vpack.c.b16 %v158, %v157
    %v169 = vpack.c.b16 %v160, %v159
    %v170 = vpack.c.b16 %v162, %v161
    %179 = vmatprep.subr.bf16.mxu0 0
    %180 = vmatpush1.bf16.msra.mxu0 %v163
    %181 = vmatprep.subr.bf16.mxu0 0
    %182 = vmatpush1.bf16.msra.mxu0 %v164
    %183 = vmatprep.subr.bf16.mxu0 0
    %184 = vmatpush1.bf16.msra.mxu0 %v165
    %185 = vmatprep.subr.bf16.mxu0 0
    %186 = vmatpush1.bf16.msra.mxu0 %v166
    %187 = vmatprep.subr.bf16.mxu0 0
    %188 = vmatpush1.bf16.msra.mxu0 %v167
    %189 = vmatprep.subr.bf16.mxu0 0
    %190 = vmatpush1.bf16.msra.mxu0 %v168
    %191 = vmatprep.subr.bf16.mxu0 0
    %192 = vmatpush1.bf16.msra.mxu0 %v169
    %193 = vmatprep.subr.bf16.mxu0 0
    %194 = vmatpush1.bf16.msra.mxu0 %v170
    %195 = vmatprep.subr.bf16.mxu0 0
    %196 = vmatpush1.bf16.msra.mxu0 0
    %197 = vmatprep.subr.bf16.mxu0 0
    %198 = vmatpush1.bf16.msra.mxu0 0
    %199 = vmatprep.subr.bf16.mxu0 0
    %200 = vmatpush1.bf16.msra.mxu0 0
    %201 = vmatprep.subr.bf16.mxu0 0
    %202 = vmatpush1.bf16.msra.mxu0 0
    %203 = vmatprep.subr.bf16.mxu0 0
    %204 = vmatpush1.bf16.msra.mxu0 0
    %205 = vmatprep.subr.bf16.mxu0 0
    %206 = vmatpush1.bf16.msra.mxu0 0
    %207 = vmatprep.subr.bf16.mxu0 0
    %208 = vmatpush1.bf16.msra.mxu0 0
    %209 = vmatprep.subr.bf16.mxu0 0
    %210 = vmatpush1.bf16.msra.mxu0 0
    %211 = vmatprep.mubr.bf16.mxu0 0
    %212 = vmatmul.mubr.bf16.gmra.mrb[0].mxu0 %v107
    %v213 = vpop.f32.mrb[0].mxu0
    %v214 = vadd.f32 %v129, %v213
    %v215 = vpop.f32.mrb[0].mxu0
    %v216 = vpop.f32.mrb[0].mxu0
    %v217 = vadd.f32 %v129, %v216
    %v218 = vpop.f32.mrb[0].mxu0
    %219 = vdwg.mxu0
    %220 = vst.msk [vmem:[#allocation2] sm:$0xff] %vm52, %v214
    %221 = vst.msk [vmem:[#allocation2 + $0x8] sm:$0xff] %vm52, %v217
    // Predicated region
    $region22: #{tpu_custom_call.1} parent=1 // pred_check
      _
    $region23: #{tpu_custom_call.1} parent=1 // pred_check_branch
      %223 = sbr.rel (0) target = $region25
    $region24: #{tpu_custom_call.1} parent=1 // pred_region
      %s225 = ssub.s32 256, 256
      %226 = vsyncadd [#allocation3], %s225
      %s227 = sshll.u32 [#allocation2], 4
      %s228 = int_to_ptr.vmem [resolvable:$true] %s227
      %233 = dma.vmem_to_hbm [thread:$0]  %s228, 256, %s5, [#allocation3], 128, 128, 8
    $region25: #{tpu_custom_call.1} parent=1 // pred_fallthru
      _
    // Predicated region
    $region26: #{tpu_custom_call.1} parent=1 // pred_check
      _
    $region27: #{tpu_custom_call.1} parent=1 // pred_check_branch
      %235 = sbr.rel (0) target = $region29
    $region28: #{tpu_custom_call.1} parent=1 // pred_region
      %236 = dma.done [#allocation3], 256
    $region29: #{tpu_custom_call.1} parent=1 // pred_fallthru
      _
    %237 = vsyncpa [#allocation3], 1

</llo_original>
